<compile_context>
chip_gen: v5e
topology: v5e:2x2
jax: 0.10.0
libtpu: 0.0.40
codegen_flags: <defaults>
</compile_context>

<pallas_src>
import functools

import jax
import jax.numpy as jnp
import numpy as np
from jax.experimental import pallas as pl
from jax.experimental.pallas import tpu as pltpu


def _make_kernel(Hp, Wp, C_in, C_pad, eps, slope, mxu_dtype):
    HW = Hp * Wp

    def kernel(x_ref, w_ref, b_ref, o_ref):
        # ---- 2x2 average pool (stride 2): pure lane arithmetic -------------
        # x_ref block: (1, Hp, Wp, 4*C_in); the four 2x2-window parities were
        # packed into the channel (lane) axis by the wrapper.
        x = x_ref[0].astype(jnp.float32)                       # (Hp, Wp, 4*C_in)
        pooled = 0.25 * (x[:, :, 0 * C_in:1 * C_in]
                         + x[:, :, 1 * C_in:2 * C_in]
                         + x[:, :, 2 * C_in:3 * C_in]
                         + x[:, :, 3 * C_in:4 * C_in])         # (Hp, Wp, C_in)

        # ---- zero-padded image built in registers (no VMEM pad scratch) ----
        zrow = jnp.zeros((1, Wp + 2, C_in), jnp.float32)
        zcol = jnp.zeros((Hp, 1, C_in), jnp.float32)
        padded = jnp.concatenate(
            [zrow, jnp.concatenate([zcol, pooled, zcol], axis=1), zrow],
            axis=0)                                            # (Hp+2, Wp+2, C_in)

        # ---- im2col: single (HW, 9*C_in) x (9*C_in, C_pad) MXU matmul ------
        taps = [padded[dy:dy + Hp, dx:dx + Wp, :].reshape(HW, C_in)
                for dy in range(3) for dx in range(3)]
        patches = jnp.concatenate(taps, axis=-1).astype(mxu_dtype)   # (HW, 9*C_in)
        conv = jnp.dot(patches, w_ref[...],
                       preferred_element_type=jnp.float32)           # (HW, C_pad)
        conv = conv + b_ref[...]

        # ---- InstanceNorm2d (affine=False, biased variance, eps) in f32 ----
        mean = jnp.mean(conv, axis=0, keepdims=True)                  # (1, C_pad)
        cen = conv - mean
        var = jnp.mean(cen * cen, axis=0, keepdims=True)
        normed = cen * jax.lax.rsqrt(var + eps)

        # ---- LeakyReLU(0.2) --------------------------------------------------
        out = jnp.where(normed >= 0, normed, slope * normed)
        o_ref[0] = out.astype(o_ref.dtype)                            # lane-dense store

    return kernel


@functools.partial(jax.jit, static_argnames=("eps", "slope", "mxu_dtype"))
def full_down_block(x_nchw, w, b, *, eps=1e-5, slope=0.2, mxu_dtype=jnp.bfloat16):
    """x_nchw: (N, C_in, H, W); w: (C_out, C_in, 3, 3); b: (C_out,).
    Returns (N, C_out, H//2, W//2), matching the PyTorch module."""
    N, C_in, H, W = x_nchw.shape
    C_out = w.shape[0]
    assert H % 2 == 0 and W % 2 == 0
    Hp, Wp = H // 2, W // 2
    C_pad = ((C_out + 127) // 128) * 128  # lane-dense output channels

    # NCHW -> NHWC, then pack both 2x2-pool parities into the channel axis:
    # (N, Hp, Wp, 4*C_in) with lane order (h-parity, w-parity, channel).
    x_nhwc = jnp.transpose(x_nchw, (0, 2, 3, 1)).astype(jnp.float32)
    x_packed = x_nhwc.reshape(N, Hp, 2, Wp, 2, C_in).transpose(0, 1, 3, 2, 4, 5)
    x_packed = x_packed.reshape(N, Hp, Wp, 4 * C_in)

    # (C_out, C_in, 3, 3) -> (9*C_in, C_pad); k index = (dy*3+dx)*C_in + c_in,
    # matching the tap-concatenation order in the kernel. Zero-pad output lanes.
    w_mat = jnp.transpose(w.astype(jnp.float32), (2, 3, 1, 0)).reshape(9 * C_in, C_out)
    w_mat = jnp.zeros((9 * C_in, C_pad), jnp.float32).at[:, :C_out].set(w_mat)
    w_mat = w_mat.astype(mxu_dtype)
    b_pad = jnp.zeros((1, C_pad), jnp.float32).at[:, :C_out].set(
        b.astype(jnp.float32).reshape(1, C_out))

    kernel = _make_kernel(Hp, Wp, C_in, C_pad, eps, slope, mxu_dtype)

    out_flat = pl.pallas_call(
        kernel,
        out_shape=jax.ShapeDtypeStruct((N, Hp * Wp, C_pad), jnp.float32),
        grid_spec=pltpu.PrefetchScalarGridSpec(
            num_scalar_prefetch=0,
            grid=(N,),
            in_specs=[
                pl.BlockSpec((1, Hp, Wp, 4 * C_in), lambda n: (n, 0, 0, 0)),
                pl.BlockSpec((9 * C_in, C_pad), lambda n: (0, 0)),   # resident weights
                pl.BlockSpec((1, C_pad), lambda n: (0, 0)),          # resident bias
            ],
            out_specs=pl.BlockSpec((1, Hp * Wp, C_pad), lambda n: (n, 0, 0)),
        ),
        compiler_params=pltpu.CompilerParams(dimension_semantics=("parallel",)),
    )(x_packed, w_mat, b_pad)

    out = out_flat[:, :, :C_out].reshape(N, Hp, Wp, C_out)
    return jnp.transpose(out, (0, 3, 1, 2))  # back to NCHW


def _reference(x_nchw, w, b, eps=1e-5, slope=0.2):
    """Pure-JAX f32 reference mirroring the PyTorch forward (for validation)."""
    x = jnp.transpose(x_nchw, (0, 2, 3, 1)).astype(jnp.float32)   # NHWC
    N, H, W, C = x.shape
    pooled = x.reshape(N, H // 2, 2, W // 2, 2, C).mean(axis=(2, 4))
    w_hwio = jnp.transpose(w.astype(jnp.float32), (2, 3, 1, 0))
    conv = jax.lax.conv_general_dilated(
        pooled, w_hwio, window_strides=(1, 1), padding="SAME",
        dimension_numbers=("NHWC", "HWIO", "NHWC")) + b.astype(jnp.float32)
    mean = conv.mean(axis=(1, 2), keepdims=True)
    var = ((conv - mean) ** 2).mean(axis=(1, 2), keepdims=True)
    normed = (conv - mean) * jax.lax.rsqrt(var + eps)
    out = jnp.where(normed >= 0, normed, slope * normed)
    return jnp.transpose(out, (0, 3, 1, 2))


if __name__ == "__main__":
    batch, in_chans, out_chans, H, W = 2, 4, 8, 16, 16

    key = jax.random.PRNGKey(0)
    kx, kw, kb = jax.random.split(key, 3)
    x = jax.random.normal(kx, (batch, in_chans, H, W), dtype=jnp.float32)
    # Deterministic synthetic conv parameters (same shapes as nn.Conv2d(in, out, 3, padding=1)).
    w = jax.random.normal(kw, (out_chans, in_chans, 3, 3), dtype=jnp.float32)
    w = w * (1.0 / np.sqrt(in_chans * 9))
    b = jax.random.normal(kb, (out_chans,), dtype=jnp.float32) * 0.1

    ref = _reference(x, w, b)

    # Optimized path: bf16 MXU operands, f32 accumulation (loosened tolerance
    # accounts only for the bf16 operand rounding of the conv).
    out_bf16 = jax.block_until_ready(full_down_block(x, w, b))
    assert out_bf16.shape == (batch, out_chans, H // 2, W // 2), out_bf16.shape
    np.testing.assert_allclose(np.asarray(out_bf16), np.asarray(ref),
                               rtol=2e-2, atol=3e-2)

    # Exactness check of the fused kernel itself with f32 MXU operands.
    out_f32 = jax.block_until_ready(full_down_block(x, w, b, mxu_dtype=jnp.float32))
    np.testing.assert_allclose(np.asarray(out_f32), np.asarray(ref),
                               rtol=1e-4, atol=1e-4)

    print("KERNEL_OK")
</pallas_src>

<mosaic_0001>
module attributes {stable_mosaic.version = 11 : i64} {
  func.func @kernel(%arg0: i32, %arg1: memref<1x8x8x16xf32, #tpu.memory_space<vmem>>, %arg2: memref<36x128xbf16, #tpu.memory_space<vmem>>, %arg3: memref<1x128xf32, #tpu.memory_space<vmem>>, %arg4: memref<1x64x128xf32, #tpu.memory_space<vmem>>) attributes {dimension_semantics = [#tpu.dimension_semantics<parallel>], iteration_bounds = array<i64: 2>, scalar_prefetch = 0 : i64, scratch_operands = 0 : i64, tpu.core_type = #tpu.core_type<tc>, window_params = [{transform_indices = @transform_0, window_bounds = array<i64: 1, 8, 8, 16>}, {pipeline_mode = #tpu.pipeline_mode<synchronous>, transform_indices = @transform_1, window_bounds = array<i64: 36, 128>}, {pipeline_mode = #tpu.pipeline_mode<synchronous>, transform_indices = @transform_2, window_bounds = array<i64: 1, 128>}, {transform_indices = @transform_3, window_bounds = array<i64: 1, 64, 128>}]} {
    %c0 = arith.constant 0 : index
    %c0_0 = arith.constant 0 : index
    %c0_1 = arith.constant 0 : index
    %c0_2 = arith.constant 0 : index
    %0 = vector.load %arg1[%c0, %c0_0, %c0_1, %c0_2] : memref<1x8x8x16xf32, #tpu.memory_space<vmem>>, vector<1x8x8x16xf32>
    %1 = vector.shape_cast %0 : vector<1x8x8x16xf32> to vector<8x8x16xf32>
    %2 = vector.extract_strided_slice %1 {offsets = [0, 0, 0], sizes = [8, 8, 4], strides = [1, 1, 1]} : vector<8x8x16xf32> to vector<8x8x4xf32>
    %3 = vector.extract_strided_slice %1 {offsets = [0, 0, 4], sizes = [8, 8, 4], strides = [1, 1, 1]} : vector<8x8x16xf32> to vector<8x8x4xf32>
    %4 = arith.addf %2, %3 : vector<8x8x4xf32>
    %5 = vector.extract_strided_slice %1 {offsets = [0, 0, 8], sizes = [8, 8, 4], strides = [1, 1, 1]} : vector<8x8x16xf32> to vector<8x8x4xf32>
    %6 = arith.addf %4, %5 : vector<8x8x4xf32>
    %7 = vector.extract_strided_slice %1 {offsets = [0, 0, 12], sizes = [8, 8, 4], strides = [1, 1, 1]} : vector<8x8x16xf32> to vector<8x8x4xf32>
    %8 = arith.addf %6, %7 : vector<8x8x4xf32>
    %cst = arith.constant 2.500000e-01 : f32
    %9 = vector.broadcast %cst : f32 to vector<8x8x4xf32>
    %10 = arith.mulf %9, %8 : vector<8x8x4xf32>
    %cst_3 = arith.constant 0.000000e+00 : f32
    %11 = vector.broadcast %cst_3 : f32 to vector<1x10x4xf32>
    %cst_4 = arith.constant 0.000000e+00 : f32
    %12 = vector.broadcast %cst_4 : f32 to vector<8x1x4xf32>
    %13 = tpu.concatenate %12, %10, %12 in 1 : vector<8x1x4xf32>, vector<8x8x4xf32>, vector<8x1x4xf32> -> vector<8x10x4xf32>
    %14 = tpu.concatenate %11, %13, %11 in 0 : vector<1x10x4xf32>, vector<8x10x4xf32>, vector<1x10x4xf32> -> vector<10x10x4xf32>
    %15 = vector.extract_strided_slice %14 {offsets = [0, 0, 0], sizes = [8, 8, 4], strides = [1, 1, 1]} : vector<10x10x4xf32> to vector<8x8x4xf32>
    %16 = vector.shape_cast %15 : vector<8x8x4xf32> to vector<64x4xf32>
    %17 = vector.extract_strided_slice %14 {offsets = [0, 1, 0], sizes = [8, 8, 4], strides = [1, 1, 1]} : vector<10x10x4xf32> to vector<8x8x4xf32>
    %18 = vector.shape_cast %17 : vector<8x8x4xf32> to vector<64x4xf32>
    %19 = vector.extract_strided_slice %14 {offsets = [0, 2, 0], sizes = [8, 8, 4], strides = [1, 1, 1]} : vector<10x10x4xf32> to vector<8x8x4xf32>
    %20 = vector.shape_cast %19 : vector<8x8x4xf32> to vector<64x4xf32>
    %21 = vector.extract_strided_slice %14 {offsets = [1, 0, 0], sizes = [8, 8, 4], strides = [1, 1, 1]} : vector<10x10x4xf32> to vector<8x8x4xf32>
    %22 = vector.shape_cast %21 : vector<8x8x4xf32> to vector<64x4xf32>
    %23 = vector.extract_strided_slice %14 {offsets = [1, 1, 0], sizes = [8, 8, 4], strides = [1, 1, 1]} : vector<10x10x4xf32> to vector<8x8x4xf32>
    %24 = vector.shape_cast %23 : vector<8x8x4xf32> to vector<64x4xf32>
    %25 = vector.extract_strided_slice %14 {offsets = [1, 2, 0], sizes = [8, 8, 4], strides = [1, 1, 1]} : vector<10x10x4xf32> to vector<8x8x4xf32>
    %26 = vector.shape_cast %25 : vector<8x8x4xf32> to vector<64x4xf32>
    %27 = vector.extract_strided_slice %14 {offsets = [2, 0, 0], sizes = [8, 8, 4], strides = [1, 1, 1]} : vector<10x10x4xf32> to vector<8x8x4xf32>
    %28 = vector.shape_cast %27 : vector<8x8x4xf32> to vector<64x4xf32>
    %29 = vector.extract_strided_slice %14 {offsets = [2, 1, 0], sizes = [8, 8, 4], strides = [1, 1, 1]} : vector<10x10x4xf32> to vector<8x8x4xf32>
    %30 = vector.shape_cast %29 : vector<8x8x4xf32> to vector<64x4xf32>
    %31 = vector.extract_strided_slice %14 {offsets = [2, 2, 0], sizes = [8, 8, 4], strides = [1, 1, 1]} : vector<10x10x4xf32> to vector<8x8x4xf32>
    %32 = vector.shape_cast %31 : vector<8x8x4xf32> to vector<64x4xf32>
    %33 = tpu.concatenate %16, %18, %20, %22, %24, %26, %28, %30, %32 in 1 : vector<64x4xf32>, vector<64x4xf32>, vector<64x4xf32>, vector<64x4xf32>, vector<64x4xf32>, vector<64x4xf32>, vector<64x4xf32>, vector<64x4xf32>, vector<64x4xf32> -> vector<64x36xf32>
    %34 = arith.truncf %33 : vector<64x36xf32> to vector<64x36xbf16>
    %c0_5 = arith.constant 0 : index
    %c0_6 = arith.constant 0 : index
    %35 = vector.load %arg2[%c0_5, %c0_6] : memref<36x128xbf16, #tpu.memory_space<vmem>>, vector<36x128xbf16>
    %cst_7 = arith.constant dense<0.000000e+00> : vector<64x128xf32>
    %36 = tpu.matmul %34, %35, %cst_7 {dimension_numbers = #tpu.dot_dimension_numbers<[1], [0], [0], [1], [0, 0, 1, 1], [], []>} : vector<64x36xbf16>, vector<36x128xbf16>, vector<64x128xf32> -> vector<64x128xf32>
    %c0_8 = arith.constant 0 : index
    %c0_9 = arith.constant 0 : index
    %37 = vector.load %arg3[%c0_8, %c0_9] : memref<1x128xf32, #tpu.memory_space<vmem>>, vector<1x128xf32>
    %38 = vector.broadcast %37 : vector<1x128xf32> to vector<64x128xf32>
    %39 = arith.addf %36, %38 : vector<64x128xf32>
    %cst_10 = arith.constant dense<0.000000e+00> : vector<128xf32>
    %40 = vector.multi_reduction <add>, %39, %cst_10 [0] : vector<64x128xf32> to vector<128xf32>
    %41 = vector.shape_cast %40 : vector<128xf32> to vector<1x128xf32>
    %cst_11 = arith.constant 6.400000e+01 : f32
    %42 = vector.broadcast %cst_11 : f32 to vector<1x128xf32>
    %43 = arith.divf %41, %42 : vector<1x128xf32>
    %44 = vector.broadcast %43 : vector<1x128xf32> to vector<64x128xf32>
    %45 = arith.subf %39, %44 : vector<64x128xf32>
    %46 = arith.mulf %45, %45 : vector<64x128xf32>
    %cst_12 = arith.constant dense<0.000000e+00> : vector<128xf32>
    %47 = vector.multi_reduction <add>, %46, %cst_12 [0] : vector<64x128xf32> to vector<128xf32>
    %48 = vector.shape_cast %47 : vector<128xf32> to vector<1x128xf32>
    %cst_13 = arith.constant 6.400000e+01 : f32
    %49 = vector.broadcast %cst_13 : f32 to vector<1x128xf32>
    %50 = arith.divf %48, %49 : vector<1x128xf32>
    %cst_14 = arith.constant 9.99999974E-6 : f32
    %51 = vector.broadcast %cst_14 : f32 to vector<1x128xf32>
    %52 = arith.addf %50, %51 : vector<1x128xf32>
    %53 = math.rsqrt %52 : vector<1x128xf32>
    %54 = vector.broadcast %53 : vector<1x128xf32> to vector<64x128xf32>
    %55 = arith.mulf %45, %54 : vector<64x128xf32>
    %cst_15 = arith.constant 0.000000e+00 : f32
    %56 = vector.broadcast %cst_15 : f32 to vector<64x128xf32>
    %57 = arith.cmpf oge, %55, %56 : vector<64x128xf32>
    %cst_16 = arith.constant 2.000000e-01 : f32
    %58 = vector.broadcast %cst_16 : f32 to vector<64x128xf32>
    %59 = arith.mulf %58, %55 : vector<64x128xf32>
    %60 = arith.select %57, %55, %59 : vector<64x128xi1>, vector<64x128xf32>
    %c0_17 = arith.constant 0 : index
    %c0_18 = arith.constant 0 : index
    %c0_19 = arith.constant 0 : index
    %61 = vector.load %arg4[%c0_17, %c0_18, %c0_19] : memref<1x64x128xf32, #tpu.memory_space<vmem>>, vector<1x64x128xf32>
    %62 = vector.shape_cast %61 : vector<1x64x128xf32> to vector<64x128xf32>
    %63 = vector.shape_cast %60 : vector<64x128xf32> to vector<1x64x128xf32>
    tpu.vector_store %arg4[%c0_17, %c0_18, %c0_19], %63 {strides = array<i32>} : memref<1x64x128xf32, #tpu.memory_space<vmem>>, vector<1x64x128xf32>,
    return
  }
  func.func @transform_0(%arg0: i32) -> (i32, i32, i32, i32) {
    %c0_i32 = arith.constant 0 : i32
    %c0_i32_0 = arith.constant 0 : i32
    %c0_i32_1 = arith.constant 0 : i32
    %c0_i32_2 = arith.constant 0 : i32
    return %arg0, %c0_i32, %c0_i32_0, %c0_i32_1 : i32, i32, i32, i32
  }
  func.func @transform_1(%arg0: i32) -> (i32, i32) {
    %c0_i32 = arith.constant 0 : i32
    %c0_i32_0 = arith.constant 0 : i32
    %c0_i32_1 = arith.constant 0 : i32
    return %c0_i32, %c0_i32_0 : i32, i32
  }
  func.func @transform_2(%arg0: i32) -> (i32, i32) {
    %c0_i32 = arith.constant 0 : i32
    %c0_i32_0 = arith.constant 0 : i32
    %c0_i32_1 = arith.constant 0 : i32
    return %c0_i32, %c0_i32_0 : i32, i32
  }
  func.func @transform_3(%arg0: i32) -> (i32, i32, i32) {
    %c0_i32 = arith.constant 0 : i32
    %c0_i32_0 = arith.constant 0 : i32
    %c0_i32_1 = arith.constant 0 : i32
    return %arg0, %c0_i32, %c0_i32_0 : i32, i32, i32
  }
}

</mosaic_0001>

<llo_original>
// kernel: full_down_block.1
$region0: #{full_down_block.1}
  #allocation0 [shape = 'u32[]', space=smem, size = 0x4, offset = 0x4, fixed_abs, tag = 'smem constant byte address 0x4 - core index']
  #allocation1 [shape = 'u32[72,128]{1,0:T(1,128)}', space=vmem, size = 0x9000, scoped, tag = 'internal scratch']
  %s0 = inlined_call_operand.vmem [shape: f32[2,8,8,16], index: 0, kind: input, shape index: {}]
  %s1 = inlined_call_operand.vmem [shape: bf16[36,128], index: 1, kind: input, shape index: {}]
  %s2 = inlined_call_operand.vmem [shape: f32[1,128], index: 2, kind: input, shape index: {}]
  %s3 = inlined_call_operand.vmem [shape: f32[2,64,128], index: 3, kind: output, shape index: {}]
  %s4 = sld [smem:[#allocation0]]
  $region45: #{full_down_block.1} parent=0
    _
  %s6 = ssub.s32 1, %s4
  %s7 = scalar_select 0, %s6, %s4
  loop: start=0, step=1, limit=4
  $region2: #{full_down_block.1} parent=0 // loop_pre_header
    _
  $region3: #{full_down_block.1} parent=0 // loop_header
    %s9 = sphi 0, %s13
    %p10 = scmp.ge.s32.totalorder %s9, 4
    %s19 = sphi 0, %s21
    %s22 = sphi 0, %s19
    %s23 = sphi 0, %s22
    %s39 = sphi 0, %s23
    %s43 = sphi 0, %s43
    %s45 = sphi 0, %s43
    %s46 = sphi 0, %s45
    %s60 = sphi 0, %s46
    %s64 = sphi 0, %s64
    %s66 = sphi 0, %s64
    %s67 = sphi 0, %s66
    %s81 = sphi 0, %s67
    %s87 = sphi 0, %s89
    %s90 = sphi 0, %s87
    %s91 = sphi 0, %s90
    %s107 = sphi 0, %s91
  $region4: #{full_down_block.1} parent=0 // loop_header_branch
    %12 = sbr.rel (%p10) target = $region8
  $region5: #{full_down_block.1} parent=0 // loop_body
    %s14 = ssub.s32 %s9, 1
    %s15 = ssub.s32 %s9, 2
    %s16 = sadd.s32 %s9, 1
    %s17 = ssub.s32 %s9, %s16
    %p18 = scmp.eq.s32.totalorder %s17, 0
    %s20 = sadd.s32 %s19, 1
    %s21 = scalar_select %p18, %s19, %s20
    %p24 = pneg %p18
    %p25 = scmp.eq.s32.totalorder %s9, 1
    %p26 = por %p24, %p25
    %p27 = scmp.ne.s32.totalorder %s19, %s22
    %p28 = scmp.eq.s32.totalorder %s9, 0
    %p29 = por %p27, %p28
    %p30 = scmp.ne.s32.totalorder %s19, %s22
    %p31 = scmp.eq.s32.totalorder %s14, 1
    %p32 = por %p30, %p31
    %p33 = scmp.ne.s32.totalorder %s22, %s23
    %p34 = scmp.eq.s32.totalorder %s14, 0
    %p35 = por %p33, %p34
    %p36 = scmp.ne.s32.totalorder %s22, %s23
    %p37 = scmp.eq.s32.totalorder %s15, 1
    %p38 = por %p36, %p37
    %p40 = scmp.ne.s32.totalorder %s23, %s39
    %p41 = scmp.eq.s32.totalorder %s15, 0
    %p42 = por %p40, %p41
    %s44 = sadd.s32 %s43, 1
    %p47 = scmp.eq.s32.totalorder %s9, 1
    %p48 = scmp.ne.s32.totalorder %s43, %s45
    %p49 = scmp.eq.s32.totalorder %s9, 0
    %p50 = por %p48, %p49
    %p51 = scmp.ne.s32.totalorder %s43, %s45
    %p52 = scmp.eq.s32.totalorder %s14, 1
    %p53 = por %p51, %p52
    %p54 = scmp.ne.s32.totalorder %s45, %s46
    %p55 = scmp.eq.s32.totalorder %s14, 0
    %p56 = por %p54, %p55
    %p57 = scmp.ne.s32.totalorder %s45, %s46
    %p58 = scmp.eq.s32.totalorder %s15, 1
    %p59 = por %p57, %p58
    %p61 = scmp.ne.s32.totalorder %s46, %s60
    %p62 = scmp.eq.s32.totalorder %s15, 0
    %p63 = por %p61, %p62
    %s65 = sadd.s32 %s64, 1
    %p68 = scmp.eq.s32.totalorder %s9, 1
    %p69 = scmp.ne.s32.totalorder %s64, %s66
    %p70 = scmp.eq.s32.totalorder %s9, 0
    %p71 = por %p69, %p70
    %p72 = scmp.ne.s32.totalorder %s64, %s66
    %p73 = scmp.eq.s32.totalorder %s14, 1
    %p74 = por %p72, %p73
    %p75 = scmp.ne.s32.totalorder %s66, %s67
    %p76 = scmp.eq.s32.totalorder %s14, 0
    %p77 = por %p75, %p76
    %p78 = scmp.ne.s32.totalorder %s66, %s67
    %p79 = scmp.eq.s32.totalorder %s15, 1
    %p80 = por %p78, %p79
    %p82 = scmp.ne.s32.totalorder %s67, %s81
    %p83 = scmp.eq.s32.totalorder %s15, 0
    %p84 = por %p82, %p83
    %s85 = ssub.s32 %s9, %s16
    %p86 = scmp.eq.s32.totalorder %s85, 0
    %s88 = sadd.s32 %s87, 1
    %s89 = scalar_select %p86, %s87, %s88
    %p92 = pneg %p86
    %p93 = scmp.eq.s32.totalorder %s9, 1
    %p94 = por %p92, %p93
    %p95 = scmp.ne.s32.totalorder %s87, %s90
    %p96 = scmp.eq.s32.totalorder %s9, 0
    %p97 = por %p95, %p96
    %p98 = scmp.ne.s32.totalorder %s87, %s90
    %p99 = scmp.eq.s32.totalorder %s14, 1
    %p100 = por %p98, %p99
    %p101 = scmp.ne.s32.totalorder %s90, %s91
    %p102 = scmp.eq.s32.totalorder %s14, 0
    %p103 = por %p101, %p102
    %p104 = scmp.ne.s32.totalorder %s90, %s91
    %p105 = scmp.eq.s32.totalorder %s15, 1
    %p106 = por %p104, %p105
    %p108 = scmp.ne.s32.totalorder %s91, %s107
    %p109 = scmp.eq.s32.totalorder %s15, 0
    %p110 = por %p108, %p109
    %p111 = scmp.le.s32.totalorder 1, %s9
    %p112 = scmp.lt.s32.totalorder %s9, 3
    %p113 = pnand %p111, %p112
    %p114 = pneg %p113
    // Predicated region
    $region9: #{full_down_block.1} parent=5 // pred_check
      _
    $region10: #{full_down_block.1} parent=5 // pred_check_branch
      %116 = sbr.rel (%p113) target = $region12
    $region11: #{full_down_block.1} parent=5 // pred_region
      %s117 = ssub.s32 %s9, 1
      // Predicated region
      $region13: #{full_down_block.1} parent=11 // pred_check
        %p118 = pneg %p56
      $region14: #{full_down_block.1} parent=11 // pred_check_branch
        %120 = sbr.rel (%p118) target = $region16
      $region15: #{full_down_block.1} parent=11 // pred_region
        _
      $region16: #{full_down_block.1} parent=11 // pred_fallthru
        _
      // Predicated region
      $region17: #{full_down_block.1} parent=11 // pred_check
        %p121 = pneg %p77
      $region18: #{full_down_block.1} parent=11 // pred_check_branch
        %123 = sbr.rel (%p121) target = $region20
      $region19: #{full_down_block.1} parent=11 // pred_region
        _
      $region20: #{full_down_block.1} parent=11 // pred_fallthru
        _
    $region12: #{full_down_block.1} parent=5 // pred_fallthru
      _
    %p124 = scmp.lt.s32.totalorder %s9, 2
    // Predicated region
    $region21: #{full_down_block.1} parent=5 // pred_check
      %p125 = pneg %p124
    $region22: #{full_down_block.1} parent=5 // pred_check_branch
      %127 = sbr.rel (%p125) target = $region24
    $region23: #{full_down_block.1} parent=5 // pred_region
      // Predicated region
      $region25: #{full_down_block.1} parent=23 // pred_check
        %p128 = pneg %p29
      $region26: #{full_down_block.1} parent=23 // pred_check_branch
        %130 = sbr.rel (%p128) target = $region28
      $region27: #{full_down_block.1} parent=23 // pred_region
        %p131 = scmp.lt.s32.totalorder %s9, 1
        %s132 = scalar_select %p131, %s9, 1
        %s133 = smul.addr %s132, 8
        %s134 = smul.addr %s133, 8
        %s135 = scalar_lea.vmem %s0, %s134
      $region28: #{full_down_block.1} parent=23 // pred_fallthru
        _
    $region24: #{full_down_block.1} parent=5 // pred_fallthru
      _
    %p136 = scmp.le.s32.totalorder 1, %s9
    %p137 = scmp.lt.s32.totalorder %s9, 3
    %p138 = pnand %p136, %p137
    %p139 = pneg %p138
    // Predicated region
    $region29: #{full_down_block.1} parent=5 // pred_check
      _
    $region30: #{full_down_block.1} parent=5 // pred_check_branch
      %141 = sbr.rel (%p138) target = $region32
    $region31: #{full_down_block.1} parent=5 // pred_region
      %s142 = ssub.s32 %s9, 1
      %p143 = scmp.lt.s32.totalorder %s14, 1
      %s144 = scalar_select %p143, %s14, 1
      %s145 = smul.addr %s144, 8
      %s146 = smul.addr %s145, 8
      %s147 = scalar_lea.vmem %s0, %s146
      %p148 = pneg %p35
      %p149 = pneg %p32
      %p150 = pneg %p56
      %p151 = pneg %p53
      %p152 = pneg %p77
      %p153 = pneg %p74
      %p154 = pneg %p103
      %p155 = pneg %p100
      %p156 = scmp.lt.s32.totalorder %s14, 1
      %s157 = scalar_select %p156, %s14, 1
      %s158 = smul.addr %s157, 8
      %s159 = smul.addr %s158, 8
      %s160 = scalar_lea.vmem %s3, %s159
      %p161 = scmp.lt.s32.totalorder %s14, 1
      %s162 = scalar_select %p161, %s14, 1
      %s163 = smul.addr %s162, 8
      %s164 = smul.addr %s163, 8
      %s165 = scalar_lea.vmem %s0, %s164
      %p166 = scmp.lt.s32.totalorder %s14, 1
      %s167 = scalar_select %p166, %s14, 1
      %s168 = smul.addr %s167, 8
      %s169 = smul.addr %s168, 8
      %s170 = scalar_lea.vmem %s3, %s169
      %v172 = vld [vmem:[%s165] sm:$0xff]
      %v173 = vld [vmem:[%s165 + $0x8] sm:$0xff]
      %v174 = vld [vmem:[%s165 + $0x10] sm:$0xff]
      %v175 = vld [vmem:[%s165 + $0x18] sm:$0xff]
      %v176 = vld [vmem:[%s165 + $0x20] sm:$0xff]
      %v177 = vld [vmem:[%s165 + $0x28] sm:$0xff]
      %v178 = vld [vmem:[%s165 + $0x30] sm:$0xff]
      %v179 = vld [vmem:[%s165 + $0x38] sm:$0xff]
      %188 = vrot.lane.b32.xlu0 %v172, 124
      %v189 = vpop.permute.xlu0 %188
      %190 = vrot.lane.b32.xlu0 %v173, 124
      %v191 = vpop.permute.xlu0 %190
      %192 = vrot.lane.b32.xlu0 %v174, 124
      %v193 = vpop.permute.xlu0 %192
      %194 = vrot.lane.b32.xlu0 %v175, 124
      %v195 = vpop.permute.xlu0 %194
      %196 = vrot.lane.b32.xlu0 %v176, 124
      %v197 = vpop.permute.xlu0 %196
      %198 = vrot.lane.b32.xlu0 %v177, 124
      %v199 = vpop.permute.xlu0 %198
      %200 = vrot.lane.b32.xlu0 %v178, 124
      %v201 = vpop.permute.xlu0 %200
      %202 = vrot.lane.b32.xlu0 %v179, 124
      %v203 = vpop.permute.xlu0 %202
      %v212 = vadd.f32 %v172, %v189
      %v213 = vadd.f32 %v173, %v191
      %v214 = vadd.f32 %v174, %v193
      %v215 = vadd.f32 %v175, %v195
      %v216 = vadd.f32 %v176, %v197
      %v217 = vadd.f32 %v177, %v199
      %v218 = vadd.f32 %v178, %v201
      %v219 = vadd.f32 %v179, %v203
      %220 = vrot.lane.b32.xlu0 %v172, 120
      %v221 = vpop.permute.xlu0 %220
      %222 = vrot.lane.b32.xlu0 %v173, 120
      %v223 = vpop.permute.xlu0 %222
      %224 = vrot.lane.b32.xlu0 %v174, 120
      %v225 = vpop.permute.xlu0 %224
      %226 = vrot.lane.b32.xlu0 %v175, 120
      %v227 = vpop.permute.xlu0 %226
      %228 = vrot.lane.b32.xlu0 %v176, 120
      %v229 = vpop.permute.xlu0 %228
      %230 = vrot.lane.b32.xlu0 %v177, 120
      %v231 = vpop.permute.xlu0 %230
      %232 = vrot.lane.b32.xlu0 %v178, 120
      %v233 = vpop.permute.xlu0 %232
      %234 = vrot.lane.b32.xlu0 %v179, 120
      %v235 = vpop.permute.xlu0 %234
      %v244 = vadd.f32 %v212, %v221
      %v245 = vadd.f32 %v213, %v223
      %v246 = vadd.f32 %v214, %v225
      %v247 = vadd.f32 %v215, %v227
      %v248 = vadd.f32 %v216, %v229
      %v249 = vadd.f32 %v217, %v231
      %v250 = vadd.f32 %v218, %v233
      %v251 = vadd.f32 %v219, %v235
      %252 = vrot.lane.b32.xlu0 %v172, 116
      %v253 = vpop.permute.xlu0 %252
      %254 = vrot.lane.b32.xlu0 %v173, 116
      %v255 = vpop.permute.xlu0 %254
      %256 = vrot.lane.b32.xlu0 %v174, 116
      %v257 = vpop.permute.xlu0 %256
      %258 = vrot.lane.b32.xlu0 %v175, 116
      %v259 = vpop.permute.xlu0 %258
      %260 = vrot.lane.b32.xlu0 %v176, 116
      %v261 = vpop.permute.xlu0 %260
      %262 = vrot.lane.b32.xlu0 %v177, 116
      %v263 = vpop.permute.xlu0 %262
      %264 = vrot.lane.b32.xlu0 %v178, 116
      %v265 = vpop.permute.xlu0 %264
      %266 = vrot.lane.b32.xlu0 %v179, 116
      %v267 = vpop.permute.xlu0 %266
      %v276 = vadd.f32 %v244, %v253
      %v277 = vadd.f32 %v245, %v255
      %v278 = vadd.f32 %v246, %v257
      %v279 = vadd.f32 %v247, %v259
      %v280 = vadd.f32 %v248, %v261
      %v281 = vadd.f32 %v249, %v263
      %v282 = vadd.f32 %v250, %v265
      %v283 = vadd.f32 %v251, %v267
      %v284 = vmul.f32 %v276, 0.25
      %v285 = vmul.f32 %v277, 0.25
      %v286 = vmul.f32 %v278, 0.25
      %v287 = vmul.f32 %v279, 0.25
      %v288 = vmul.f32 %v280, 0.25
      %v289 = vmul.f32 %v281, 0.25
      %v290 = vmul.f32 %v282, 0.25
      %v291 = vmul.f32 %v283, 0.25
      %v300 = vrot.slane %v284, 7
      %v301 = vrot.slane %v285, 7
      %v302 = vrot.slane %v286, 7
      %v303 = vrot.slane %v287, 7
      %v304 = vrot.slane %v288, 7
      %v305 = vrot.slane %v289, 7
      %v306 = vrot.slane %v290, 7
      %v307 = vrot.slane %v291, 7
      %vm316 = vcmask 1040384
      %v317 = vsel %vm316, 0.0, %v300
      %v318 = vsel %vm316, 0.0, %v301
      %v319 = vsel %vm316, 0.0, %v302
      %v320 = vsel %vm316, 0.0, %v303
      %v321 = vsel %vm316, 0.0, %v304
      %v322 = vsel %vm316, 0.0, %v305
      %v323 = vsel %vm316, 0.0, %v306
      %v324 = vsel %vm316, 0.0, %v307
      %v325 = vsel %vm316, %v300, 0.0
      %v326 = vsel %vm316, %v301, 0.0
      %v327 = vsel %vm316, %v302, 0.0
      %v328 = vsel %vm316, %v303, 0.0
      %v329 = vsel %vm316, %v304, 0.0
      %v330 = vsel %vm316, %v305, 0.0
      %v331 = vsel %vm316, %v306, 0.0
      %v332 = vsel %vm316, %v307, 0.0
      %vm348 = vcmask 1046528
      %v349 = vrot.slane 0.0, 1
      %v350 = vsel %vm348, %v349, %v349
      %v351 = vrot.slane %v317, 1
      %v352 = vrot.slane %v325, 1
      %v353 = vsel %vm348, %v351, %v352
      %v354 = vrot.slane %v318, 1
      %v355 = vrot.slane %v326, 1
      %v356 = vsel %vm348, %v354, %v355
      %v357 = vrot.slane %v319, 1
      %v358 = vrot.slane %v327, 1
      %v359 = vsel %vm348, %v357, %v358
      %v360 = vrot.slane %v320, 1
      %v361 = vrot.slane %v328, 1
      %v362 = vsel %vm348, %v360, %v361
      %v363 = vrot.slane %v321, 1
      %v364 = vrot.slane %v329, 1
      %v365 = vsel %vm348, %v363, %v364
      %v366 = vrot.slane %v322, 1
      %v367 = vrot.slane %v330, 1
      %v368 = vsel %vm348, %v366, %v367
      %v369 = vrot.slane %v323, 1
      %v370 = vrot.slane %v331, 1
      %v371 = vsel %vm348, %v369, %v370
      %vm372 = vcmask 1045504
      %v373 = vrot.slane 0.0, 2
      %v374 = vsel %vm372, %v373, %v373
      %v375 = vrot.slane %v317, 2
      %v376 = vrot.slane %v325, 2
      %v377 = vsel %vm372, %v375, %v376
      %v378 = vrot.slane %v318, 2
      %v379 = vrot.slane %v326, 2
      %v380 = vsel %vm372, %v378, %v379
      %v381 = vrot.slane %v319, 2
      %v382 = vrot.slane %v327, 2
      %v383 = vsel %vm372, %v381, %v382
      %v384 = vrot.slane %v320, 2
      %v385 = vrot.slane %v328, 2
      %v386 = vsel %vm372, %v384, %v385
      %v387 = vrot.slane %v321, 2
      %v388 = vrot.slane %v329, 2
      %v389 = vsel %vm372, %v387, %v388
      %v390 = vrot.slane %v322, 2
      %v391 = vrot.slane %v330, 2
      %v392 = vsel %vm372, %v390, %v391
      %v393 = vrot.slane %v323, 2
      %v394 = vrot.slane %v331, 2
      %v395 = vsel %vm372, %v393, %v394
      %v398 = vrot.slane %v324, 1
      %v399 = vrot.slane %v332, 1
      %v400 = vsel %vm348, %v398, %v399
      %v401 = vrot.slane %v324, 2
      %v402 = vrot.slane %v332, 2
      %v403 = vsel %vm372, %v401, %v402
      %404 = vrot.lane.b32.xlu0 %v350, 4
      %v405 = vpop.permute.xlu0 %404
      %406 = vrot.lane.b32.xlu0 %v353, 4
      %v407 = vpop.permute.xlu0 %406
      %408 = vrot.lane.b32.xlu0 %v356, 4
      %v409 = vpop.permute.xlu0 %408
      %410 = vrot.lane.b32.xlu0 %v359, 4
      %v411 = vpop.permute.xlu0 %410
      %412 = vrot.lane.b32.xlu0 %v362, 4
      %v413 = vpop.permute.xlu0 %412
      %414 = vrot.lane.b32.xlu0 %v365, 4
      %v415 = vpop.permute.xlu0 %414
      %416 = vrot.lane.b32.xlu0 %v368, 4
      %v417 = vpop.permute.xlu0 %416
      %418 = vrot.lane.b32.xlu0 %v371, 4
      %v419 = vpop.permute.xlu0 %418
      %428 = vrot.lane.b32.xlu0 %v374, 8
      %v429 = vpop.permute.xlu0 %428
      %430 = vrot.lane.b32.xlu0 %v377, 8
      %v431 = vpop.permute.xlu0 %430
      %432 = vrot.lane.b32.xlu0 %v380, 8
      %v433 = vpop.permute.xlu0 %432
      %434 = vrot.lane.b32.xlu0 %v383, 8
      %v435 = vpop.permute.xlu0 %434
      %436 = vrot.lane.b32.xlu0 %v386, 8
      %v437 = vpop.permute.xlu0 %436
      %438 = vrot.lane.b32.xlu0 %v389, 8
      %v439 = vpop.permute.xlu0 %438
      %440 = vrot.lane.b32.xlu0 %v392, 8
      %v441 = vpop.permute.xlu0 %440
      %442 = vrot.lane.b32.xlu0 %v395, 8
      %v443 = vpop.permute.xlu0 %442
      %452 = vrot.lane.b32.xlu0 %v317, 12
      %v453 = vpop.permute.xlu0 %452
      %454 = vrot.lane.b32.xlu0 %v318, 12
      %v455 = vpop.permute.xlu0 %454
      %456 = vrot.lane.b32.xlu0 %v319, 12
      %v457 = vpop.permute.xlu0 %456
      %458 = vrot.lane.b32.xlu0 %v320, 12
      %v459 = vpop.permute.xlu0 %458
      %460 = vrot.lane.b32.xlu0 %v321, 12
      %v461 = vpop.permute.xlu0 %460
      %462 = vrot.lane.b32.xlu0 %v322, 12
      %v463 = vpop.permute.xlu0 %462
      %464 = vrot.lane.b32.xlu0 %v323, 12
      %v465 = vpop.permute.xlu0 %464
      %466 = vrot.lane.b32.xlu0 %v324, 12
      %v467 = vpop.permute.xlu0 %466
      %476 = vrot.lane.b32.xlu0 %v353, 16
      %v477 = vpop.permute.xlu0 %476
      %478 = vrot.lane.b32.xlu0 %v356, 16
      %v479 = vpop.permute.xlu0 %478
      %480 = vrot.lane.b32.xlu0 %v359, 16
      %v481 = vpop.permute.xlu0 %480
      %482 = vrot.lane.b32.xlu0 %v362, 16
      %v483 = vpop.permute.xlu0 %482
      %484 = vrot.lane.b32.xlu0 %v365, 16
      %v485 = vpop.permute.xlu0 %484
      %486 = vrot.lane.b32.xlu0 %v368, 16
      %v487 = vpop.permute.xlu0 %486
      %488 = vrot.lane.b32.xlu0 %v371, 16
      %v489 = vpop.permute.xlu0 %488
      %490 = vrot.lane.b32.xlu0 %v400, 16
      %v491 = vpop.permute.xlu0 %490
      %500 = vrot.lane.b32.xlu0 %v377, 20
      %v501 = vpop.permute.xlu0 %500
      %502 = vrot.lane.b32.xlu0 %v380, 20
      %v503 = vpop.permute.xlu0 %502
      %504 = vrot.lane.b32.xlu0 %v383, 20
      %v505 = vpop.permute.xlu0 %504
      %506 = vrot.lane.b32.xlu0 %v386, 20
      %v507 = vpop.permute.xlu0 %506
      %508 = vrot.lane.b32.xlu0 %v389, 20
      %v509 = vpop.permute.xlu0 %508
      %510 = vrot.lane.b32.xlu0 %v392, 20
      %v511 = vpop.permute.xlu0 %510
      %512 = vrot.lane.b32.xlu0 %v395, 20
      %v513 = vpop.permute.xlu0 %512
      %514 = vrot.lane.b32.xlu0 %v403, 20
      %v515 = vpop.permute.xlu0 %514
      %524 = vrot.lane.b32.xlu0 %v318, 24
      %v525 = vpop.permute.xlu0 %524
      %526 = vrot.lane.b32.xlu0 %v319, 24
      %v527 = vpop.permute.xlu0 %526
      %528 = vrot.lane.b32.xlu0 %v320, 24
      %v529 = vpop.permute.xlu0 %528
      %530 = vrot.lane.b32.xlu0 %v321, 24
      %v531 = vpop.permute.xlu0 %530
      %532 = vrot.lane.b32.xlu0 %v322, 24
      %v533 = vpop.permute.xlu0 %532
      %534 = vrot.lane.b32.xlu0 %v323, 24
      %v535 = vpop.permute.xlu0 %534
      %536 = vrot.lane.b32.xlu0 %v324, 24
      %v537 = vpop.permute.xlu0 %536
      %538 = vrot.lane.b32.xlu0 0.0, 24
      %v539 = vpop.permute.xlu0 %538
      %548 = vrot.lane.b32.xlu0 %v356, 28
      %v549 = vpop.permute.xlu0 %548
      %550 = vrot.lane.b32.xlu0 %v359, 28
      %v551 = vpop.permute.xlu0 %550
      %552 = vrot.lane.b32.xlu0 %v362, 28
      %v553 = vpop.permute.xlu0 %552
      %554 = vrot.lane.b32.xlu0 %v365, 28
      %v555 = vpop.permute.xlu0 %554
      %556 = vrot.lane.b32.xlu0 %v368, 28
      %v557 = vpop.permute.xlu0 %556
      %558 = vrot.lane.b32.xlu0 %v371, 28
      %v559 = vpop.permute.xlu0 %558
      %560 = vrot.lane.b32.xlu0 %v400, 28
      %v561 = vpop.permute.xlu0 %560
      %562 = vrot.lane.b32.xlu0 %v350, 28
      %v563 = vpop.permute.xlu0 %562
      %572 = vrot.lane.b32.xlu0 %v380, 32
      %v573 = vpop.permute.xlu0 %572
      %574 = vrot.lane.b32.xlu0 %v383, 32
      %v575 = vpop.permute.xlu0 %574
      %576 = vrot.lane.b32.xlu0 %v386, 32
      %v577 = vpop.permute.xlu0 %576
      %578 = vrot.lane.b32.xlu0 %v389, 32
      %v579 = vpop.permute.xlu0 %578
      %580 = vrot.lane.b32.xlu0 %v392, 32
      %v581 = vpop.permute.xlu0 %580
      %582 = vrot.lane.b32.xlu0 %v395, 32
      %v583 = vpop.permute.xlu0 %582
      %584 = vrot.lane.b32.xlu0 %v403, 32
      %v585 = vpop.permute.xlu0 %584
      %586 = vrot.lane.b32.xlu0 %v374, 32
      %v587 = vpop.permute.xlu0 %586
      %vm596 = vcmask 31744
      %v597 = vsel %vm596, 0.0, %v405
      %v598 = vsel %vm596, %v317, %v407
      %v599 = vsel %vm596, %v318, %v409
      %v600 = vsel %vm596, %v319, %v411
      %v601 = vsel %vm596, %v320, %v413
      %v602 = vsel %vm596, %v321, %v415
      %v603 = vsel %vm596, %v322, %v417
      %v604 = vsel %vm596, %v323, %v419
      %vm605 = vcmask 64512
      %v606 = vsel %vm605, %v597, %v429
      %v607 = vsel %vm605, %v598, %v431
      %v608 = vsel %vm605, %v599, %v433
      %v609 = vsel %vm605, %v600, %v435
      %v610 = vsel %vm605, %v601, %v437
      %v611 = vsel %vm605, %v602, %v439
      %v612 = vsel %vm605, %v603, %v441
      %v613 = vsel %vm605, %v604, %v443
      %vm614 = vcmask 97280
      %v615 = vsel %vm614, %v606, %v453
      %v616 = vsel %vm614, %v607, %v455
      %v617 = vsel %vm614, %v608, %v457
      %v618 = vsel %vm614, %v609, %v459
      %v619 = vsel %vm614, %v610, %v461
      %v620 = vsel %vm614, %v611, %v463
      %v621 = vsel %vm614, %v612, %v465
      %v622 = vsel %vm614, %v613, %v467
      %vm623 = vcmask 130048
      %v624 = vsel %vm623, %v615, %v477
      %v625 = vsel %vm623, %v616, %v479
      %v626 = vsel %vm623, %v617, %v481
      %v627 = vsel %vm623, %v618, %v483
      %v628 = vsel %vm623, %v619, %v485
      %v629 = vsel %vm623, %v620, %v487
      %v630 = vsel %vm623, %v621, %v489
      %v631 = vsel %vm623, %v622, %v491
      %vm632 = vcmask 162816
      %v633 = vsel %vm632, %v624, %v501
      %v634 = vsel %vm632, %v625, %v503
      %v635 = vsel %vm632, %v626, %v505
      %v636 = vsel %vm632, %v627, %v507
      %v637 = vsel %vm632, %v628, %v509
      %v638 = vsel %vm632, %v629, %v511
      %v639 = vsel %vm632, %v630, %v513
      %v640 = vsel %vm632, %v631, %v515
      %vm641 = vcmask 195584
      %v642 = vsel %vm641, %v633, %v525
      %v643 = vsel %vm641, %v634, %v527
      %v644 = vsel %vm641, %v635, %v529
      %v645 = vsel %vm641, %v636, %v531
      %v646 = vsel %vm641, %v637, %v533
      %v647 = vsel %vm641, %v638, %v535
      %v648 = vsel %vm641, %v639, %v537
      %v649 = vsel %vm641, %v640, %v539
      %vm650 = vcmask 228352
      %v651 = vsel %vm650, %v642, %v549
      %v652 = vsel %vm650, %v643, %v551
      %v653 = vsel %vm650, %v644, %v553
      %v654 = vsel %vm650, %v645, %v555
      %v655 = vsel %vm650, %v646, %v557
      %v656 = vsel %vm650, %v647, %v559
      %v657 = vsel %vm650, %v648, %v561
      %v658 = vsel %vm650, %v649, %v563
      %vm659 = vcmask 261120
      %v660 = vsel %vm659, %v651, %v573
      %v661 = vsel %vm659, %v652, %v575
      %v662 = vsel %vm659, %v653, %v577
      %v663 = vsel %vm659, %v654, %v579
      %v664 = vsel %vm659, %v655, %v581
      %v665 = vsel %vm659, %v656, %v583
      %v666 = vsel %vm659, %v657, %v585
      %v667 = vsel %vm659, %v658, %v587
      %v668 = vpack.c.bf16 %v661, %v660
      %v669 = vpack.c.bf16 %v663, %v662
      %v670 = vpack.c.bf16 %v665, %v664
      %v671 = vpack.c.bf16 %v667, %v666
      %v672 = vld [vmem:[%s1] sm:$0xf]
      %v673 = vld [vmem:[%s1 + $0x4] sm:$0xf]
      %v674 = vld [vmem:[%s1 + $0x8] sm:$0xf]
      %v675 = vld [vmem:[%s1 + $0xc] sm:$0xf]
      %v676 = vld [vmem:[%s1 + $0x10] sm:$0x3]
      %v677 = vld [vmem:[%s2] sm:$0x1]
      %v679 = vperm.slane %v677, 0
      %v686 = vunpack.c.l.b16 %v672
      %v687 = vunpack.c.l.b16 %v673
      %v688 = vunpack.c.l.b16 %v674
      %v689 = vunpack.c.l.b16 %v675
      %v690 = vunpack.c.l.b16 %v676
      %v691 = vpack.c.b16 %v687, %v686
      %v692 = vpack.c.b16 %v689, %v688
      %v693 = vpack.c.b16 %v690, %v690
      %vm696 = vcmask 293888
      %v698 = vsel %vm696, %v668, 0
      %v701 = vsel %vm696, %v669, 0
      %v704 = vsel %vm696, %v670, 0
      %v707 = vsel %vm696, %v671, 0
      %vm709 = vcmask 1041408
      %v711 = vsel %vm709, %v693, 0
      %713 = vmatpush.bf16.msra.mxu0 0
      %714 = vmatpush.bf16.msra.mxu0 0
      %715 = vmatpush.bf16.msra.mxu0 0
      %716 = vmatpush.bf16.msra.mxu0 0
      %717 = vmatpush.bf16.msra.mxu0 0
      %718 = vmatpush.bf16.msra.mxu0 %v711
      %719 = vmatpush.bf16.msra.mxu0 %v692
      %720 = vmatpush.bf16.msra.mxu0 %v691
      %721 = vmatmul.bf16.gmra.mxu0 %v698
      %v722 = vpop.f32.mrf.mxu0
      %v723 = vadd.f32 %v679, %v722
      %v724 = vpop.f32.mrf.mxu0
      %v725 = vadd.f32 %v679, %v724
      %726 = vmatmul.bf16.gmra.mxu0 %v701
      %v727 = vpop.f32.mrf.mxu0
      %v728 = vadd.f32 %v679, %v727
      %v729 = vpop.f32.mrf.mxu0
      %v730 = vadd.f32 %v679, %v729
      %731 = vmatmul.bf16.gmra.mxu0 %v704
      %v732 = vpop.f32.mrf.mxu0
      %v733 = vadd.f32 %v679, %v732
      %v734 = vpop.f32.mrf.mxu0
      %v735 = vadd.f32 %v679, %v734
      %736 = vmatmul.bf16.gmra.mxu0 %v707
      %v737 = vpop.f32.mrf.mxu0
      %v738 = vadd.f32 %v679, %v737
      %v739 = vpop.f32.mrf.mxu0
      %v740 = vadd.f32 %v679, %v739
      %741 = vdwg.mxu0
      %v742 = vadd.f32 %v723, %v725
      %v743 = vadd.f32 %v742, %v728
      %v744 = vadd.f32 %v743, %v730
      %v745 = vadd.f32 %v744, %v733
      %v746 = vadd.f32 %v745, %v735
      %v747 = vadd.f32 %v746, %v738
      %v748 = vadd.f32 %v747, %v740
      %v749 = vrot.slane %v748, 4
      %v750 = vadd.f32 %v748, %v749
      %v751 = vrot.slane %v750, 2
      %v752 = vadd.f32 %v750, %v751
      %v753 = vrot.slane %v752, 1
      %v754 = vadd.f32 %v752, %v753
      %v755 = vrcp.pop 64.0
      %v756 = vmul.f32 64.0, %v755
      %v757 = vsub.f32 1.0, %v756
      %v758 = vmul.f32 %v755, %v757
      %v759 = vadd.f32 %v755, %v758
      %vm760 = vweird.f32 %v755
      %v761 = vsel %vm760, %v755, %v759
      %v762 = vmul.f32 %v754, %v761
      %v763 = vsub.f32 %v723, %v762
      %v764 = vsub.f32 %v725, %v762
      %v765 = vsub.f32 %v728, %v762
      %v766 = vsub.f32 %v730, %v762
      %v767 = vsub.f32 %v733, %v762
      %v768 = vsub.f32 %v735, %v762
      %v769 = vsub.f32 %v738, %v762
      %v770 = vsub.f32 %v740, %v762
      %v771 = vmul.f32 %v763, %v763
      %v772 = vmul.f32 %v764, %v764
      %v773 = vmul.f32 %v765, %v765
      %v774 = vmul.f32 %v766, %v766
      %v775 = vmul.f32 %v767, %v767
      %v776 = vmul.f32 %v768, %v768
      %v777 = vmul.f32 %v769, %v769
      %v778 = vmul.f32 %v770, %v770
      %v779 = vadd.f32 %v771, %v772
      %v780 = vadd.f32 %v779, %v773
      %v781 = vadd.f32 %v780, %v774
      %v782 = vadd.f32 %v781, %v775
      %v783 = vadd.f32 %v782, %v776
      %v784 = vadd.f32 %v783, %v777
      %v785 = vadd.f32 %v784, %v778
      %v786 = vrot.slane %v785, 4
      %v787 = vadd.f32 %v785, %v786
      %v788 = vrot.slane %v787, 2
      %v789 = vadd.f32 %v787, %v788
      %v790 = vrot.slane %v789, 1
      %v791 = vadd.f32 %v789, %v790
      %v792 = vmul.f32 %v791, %v761
      %v793 = vadd.f32 %v792, 1e-05
      %v794 = vrsqrt.pop %v793
      %v795 = vmul.f32 %v794, %v793
      %v796 = vmul.f32 %v795, %v794
      %v797 = vmul.f32 0.5, %v796
      %v798 = vsub.f32 1.5, %v797
      %v799 = vmul.f32 %v794, %v798
      %vm800 = vweird.f32 %v793
      %vm801 = vweird.f32 %v794
      %vm802 = vmor %vm800, %vm801
      %v803 = vsel %vm802, %v794, %v799
      %v804 = vmul.f32 %v763, %v803
      %v805 = vmul.f32 %v764, %v803
      %v806 = vmul.f32 %v765, %v803
      %v807 = vmul.f32 %v766, %v803
      %v808 = vmul.f32 %v767, %v803
      %v809 = vmul.f32 %v768, %v803
      %v810 = vmul.f32 %v769, %v803
      %v811 = vmul.f32 %v770, %v803
      %vm812 = vcmp.ge.f32.partialorder %v804, 0.0
      %vm813 = vcmp.ge.f32.partialorder %v805, 0.0
      %vm814 = vcmp.ge.f32.partialorder %v806, 0.0
      %vm815 = vcmp.ge.f32.partialorder %v807, 0.0
      %vm816 = vcmp.ge.f32.partialorder %v808, 0.0
      %vm817 = vcmp.ge.f32.partialorder %v809, 0.0
      %vm818 = vcmp.ge.f32.partialorder %v810, 0.0
      %vm819 = vcmp.ge.f32.partialorder %v811, 0.0
      %v820 = vmul.f32 %v804, 0.2
      %v821 = vmul.f32 %v805, 0.2
      %v822 = vmul.f32 %v806, 0.2
      %v823 = vmul.f32 %v807, 0.2
      %v824 = vmul.f32 %v808, 0.2
      %v825 = vmul.f32 %v809, 0.2
      %v826 = vmul.f32 %v810, 0.2
      %v827 = vmul.f32 %v811, 0.2
      %v828 = vsel %vm812, %v804, %v820
      %v829 = vsel %vm813, %v805, %v821
      %v830 = vsel %vm814, %v806, %v822
      %v831 = vsel %vm815, %v807, %v823
      %v832 = vsel %vm816, %v808, %v824
      %v833 = vsel %vm817, %v809, %v825
      %v834 = vsel %vm818, %v810, %v826
      %v835 = vsel %vm819, %v811, %v827
      %836 = vst [vmem:[%s170] sm:$0xff] %v828
      %837 = vst [vmem:[%s170 + $0x8] sm:$0xff] %v829
      %838 = vst [vmem:[%s170 + $0x10] sm:$0xff] %v830
      %839 = vst [vmem:[%s170 + $0x18] sm:$0xff] %v831
      %840 = vst [vmem:[%s170 + $0x20] sm:$0xff] %v832
      %841 = vst [vmem:[%s170 + $0x28] sm:$0xff] %v833
      %842 = vst [vmem:[%s170 + $0x30] sm:$0xff] %v834
      %843 = vst [vmem:[%s170 + $0x38] sm:$0xff] %v835
      %p844 = scmp.lt.s32.totalorder %s14, 1
      %s845 = scalar_select %p844, %s14, 1
      %s846 = smul.addr %s845, 8
      %s847 = smul.addr %s846, 8
      %s848 = scalar_lea.vmem %s3, %s847
      // Predicated region
      $region33: #{full_down_block.1} parent=31 // pred_check
        %p849 = pneg %p100
      $region34: #{full_down_block.1} parent=31 // pred_check_branch
        %851 = sbr.rel (%p849) target = $region36
      $region35: #{full_down_block.1} parent=31 // pred_region
        _
      $region36: #{full_down_block.1} parent=31 // pred_fallthru
        _
    $region32: #{full_down_block.1} parent=5 // pred_fallthru
      _
    %p852 = scmp.le.s32.totalorder 2, %s9
    // Predicated region
    $region37: #{full_down_block.1} parent=5 // pred_check
      %p853 = pneg %p852
    $region38: #{full_down_block.1} parent=5 // pred_check_branch
      %855 = sbr.rel (%p853) target = $region40
    $region39: #{full_down_block.1} parent=5 // pred_region
      %s856 = ssub.s32 %s9, 2
      // Predicated region
      $region41: #{full_down_block.1} parent=39 // pred_check
        %p857 = pneg %p106
      $region42: #{full_down_block.1} parent=39 // pred_check_branch
        %859 = sbr.rel (%p857) target = $region44
      $region43: #{full_down_block.1} parent=39 // pred_region
        %p860 = scmp.lt.s32.totalorder %s15, 1
        %s861 = scalar_select %p860, %s15, 1
        %s862 = smul.addr %s861, 8
        %s863 = smul.addr %s862, 8
        %s864 = scalar_lea.vmem %s3, %s863
      $region44: #{full_down_block.1} parent=39 // pred_fallthru
        _
    $region40: #{full_down_block.1} parent=5 // pred_fallthru
      _
  $region6: #{full_down_block.1} parent=0 // loop_footer
    %s13 = sadd.s32 1, %s9
  $region7: #{full_down_block.1} parent=0 // loop_footer_branch
    %8 = sbr.rel target = $region3
  $region8: #{full_down_block.1} parent=0 // loop_exit
    _

</llo_original>
